<compile_context>
chip_gen: v7x
topology: tpu7x:2x2x1
jax: 0.10.0
libtpu: 0.0.40
codegen_flags: <defaults>
</compile_context>

<pallas_src>
import numpy as np
import jax
import jax.numpy as jnp
from jax.experimental import pallas as pl
from jax.experimental.pallas import tpu as pltpu

OUTPUT_DIM = 1
C1, C2 = 50, 100           # conv1 / conv2 output channels
P1_OUT, P2_OUT = 100, 50   # adaptive-avg-pool output lengths


def adaptive_avg_pool_matrix(l_in, l_out):
    """P of shape (l_in, l_out) s.t. (x @ P) == AdaptiveAvgPool1d(l_out)(x) (PyTorch binning)."""
    P = np.zeros((l_in, l_out), dtype=np.float32)
    for j in range(l_out):
        start = (j * l_in) // l_out
        end = -((-(j + 1) * l_in) // l_out)      # ceil((j+1)*l_in / l_out)
        P[start:end, j] = 1.0 / (end - start)
    return jnp.asarray(P)


def cnn_affine_kernel(x_ref, a_ref, c_ref, out_ref, acc_ref):
    """One (TB, TK) tile of y = X @ A + const.

    x_ref : (TB, TK) f32   — flattened (B, c_in*L) input tile
    a_ref : (TK, O)  bf16  — folded affine weight tile
    c_ref : (1,  O)  f32   — folded bias
    out   : (TB, O)  f32
    acc   : (TB, O)  f32 VMEM scratch (reduction over the K grid axis)
    """
    k = pl.program_id(1)

    @pl.when(k == 0)
    def _init():
        acc_ref[...] = jnp.zeros_like(acc_ref)

    # bf16 MXU operands, f32 accumulation (native MXU path on v5e/v6e/v7x).
    xb = x_ref[...].astype(jnp.bfloat16)
    acc_ref[...] += jnp.dot(xb, a_ref[...], preferred_element_type=jnp.float32)

    @pl.when(k == pl.num_programs(1) - 1)
    def _finalize():
        out_ref[...] = (acc_ref[...] + c_ref[...]).astype(out_ref.dtype)


def cnn_forward(x, params, *, tb_max=256, max_tk=8192):
    """x: (B, input_dim, L) float32 (NCL, same as PyTorch Conv1d). Returns (B, OUTPUT_DIM) f32."""
    w1, b1, w2, b2, wfc, bfc = params
    if w1.ndim == 3:           # nn.Conv1d weight (out, in, 1) -> (out, in)
        w1 = w1[..., 0]
    if w2.ndim == 3:
        w2 = w2[..., 0]

    B, c_in, L = x.shape
    O = wfc.shape[0]

    # ---- exact affine fold of the whole network (batch independent, ~2 MFLOP) ----
    P1 = adaptive_avg_pool_matrix(L, P1_OUT)        # (L, 100)
    P2 = adaptive_avg_pool_matrix(P1_OUT, P2_OUT)   # (100, 50)
    wfc_r = wfc.reshape(O, C2, P2_OUT)              # torch flatten order: (channel, length)
    # G[o,k,j]  = sum_{c,m} Wfc[o,c,m] * W2[c,k] * P2[j,m]
    G = jnp.einsum("ocm,ck,jm->okj", wfc_r, w2, P2)
    # A[o,i,l]  = sum_{k,j} G[o,k,j] * W1[k,i] * P1[l,j]
    A = jnp.einsum("okj,ki,lj->oil", G, w1, P1)
    # const[o]  = bfc[o] + sum_{c,m} Wfc[o,c,m]*b2[c] + sum_{k,j} G[o,k,j]*b1[k]
    #             (pool columns sum to 1, so biases commute through the pools exactly)
    const = (bfc
             + jnp.einsum("ocm,c->o", wfc_r, b2)
             + jnp.einsum("okj,k->o", G, b1))

    K = c_in * L
    A2 = A.reshape(O, K).T.astype(jnp.bfloat16)           # (K, O), matches x row-major flatten
    const_row = const.reshape(1, O).astype(jnp.float32)
    x2 = x.reshape(B, K)                                   # free reshape; stays f32 in HBM

    # ---- reduction (K) tiling: only kicks in for very large c_in*L (v7x 64 MiB VMEM safety) ----
    if K <= max_tk:
        TK, K_pad = K, K
    else:
        TK = max_tk                                        # multiple of 128 -> lane aligned
        K_pad = pl.cdiv(K, TK) * TK
        x2 = jnp.pad(x2, ((0, 0), (0, K_pad - K)))         # zero-pad: exactly neutral in the dot
        A2 = jnp.pad(A2, ((0, K_pad - K), (0, 0)))

    # ---- batch tiling: >=2 tiles when possible so the parallel axis splits across v7x's 2 TCs ----
    if B < 16:
        TB = B                        # block dim == full array dim (always legal)
    else:
        TB = min(tb_max, ((B + 15) // 16) * 8)   # ~ceil(B/2) rounded to a sublane multiple
    # Partial last batch tile (B % TB != 0): rows are independent, Pallas masks OOB output rows,
    # so garbage in OOB input rows never contaminates valid results.

    grid = (pl.cdiv(B, TB), K_pad // TK)

    grid_spec = pltpu.PrefetchScalarGridSpec(
        num_scalar_prefetch=0,
        grid=grid,
        in_specs=[
            pl.BlockSpec((TB, TK), lambda b, k: (b, k)),   # x tile
            pl.BlockSpec((TK, O), lambda b, k: (k, 0)),    # folded weight (constant over b)
            pl.BlockSpec((1, O), lambda b, k: (0, 0)),     # folded bias (resident)
        ],
        out_specs=pl.BlockSpec((TB, O), lambda b, k: (b, 0)),
        scratch_shapes=[pltpu.VMEM((TB, O), jnp.float32)],
    )

    return pl.pallas_call(
        cnn_affine_kernel,
        out_shape=jax.ShapeDtypeStruct((B, O), jnp.float32),
        grid_spec=grid_spec,
        compiler_params=pltpu.CompilerParams(
            dimension_semantics=("parallel", "arbitrary")),
    )(x2, A2, const_row)


if __name__ == "__main__":
    key = jax.random.PRNGKey(0)
    B, input_dim, L = 2, 8, 128

    keys = jax.random.split(key, 7)
    x = jax.random.normal(keys[0], (B, input_dim, L), dtype=jnp.float32)
    # Deterministic synthetic parameters (shapes match nn.Conv1d(k=1) / nn.Linear).
    w1_3d = jax.random.normal(keys[1], (C1, input_dim, 1), dtype=jnp.float32) * 0.1
    b1 = jax.random.normal(keys[2], (C1,), dtype=jnp.float32) * 0.1
    w2_3d = jax.random.normal(keys[3], (C2, C1, 1), dtype=jnp.float32) * 0.1
    b2 = jax.random.normal(keys[4], (C2,), dtype=jnp.float32) * 0.1
    wfc = jax.random.normal(keys[5], (OUTPUT_DIM, C2 * P2_OUT), dtype=jnp.float32) * 0.01
    bfc = jax.random.normal(keys[6], (OUTPUT_DIM,), dtype=jnp.float32) * 0.1

    out = cnn_forward(x, (w1_3d, b1, w2_3d, b2, wfc, bfc))
    out = jax.block_until_ready(out)

    # Pure-JAX reference in the original (PyTorch) op order.  The reference consumes the same
    # bf16-rounded x the kernel's MXU sees, so the comparison isolates kernel + fold correctness.
    w1 = w1_3d[..., 0]
    w2 = w2_3d[..., 0]
    xq = x.astype(jnp.bfloat16).astype(jnp.float32)
    P1 = adaptive_avg_pool_matrix(L, P1_OUT)
    P2 = adaptive_avg_pool_matrix(P1_OUT, P2_OUT)
    h1 = jnp.einsum("ki,bil->bkl", w1, xq) + b1[None, :, None]      # conv1
    p1 = jnp.einsum("bkl,lj->bkj", h1, P1)                          # pool1 -> (B, 50, 100)
    h2 = jnp.einsum("ck,bkj->bcj", w2, p1) + b2[None, :, None]      # conv2
    p2 = jnp.einsum("bcj,jm->bcm", h2, P2)                          # pool2 -> (B, 100, 50)
    ref = p2.reshape(B, -1) @ wfc.T + bfc[None, :]                  # flatten + fc

    assert out.shape == (B, OUTPUT_DIM)
    assert jnp.allclose(out, ref, atol=2e-3, rtol=2e-3), (out, ref)

    print("KERNEL_OK")
</pallas_src>

<mosaic_0001>
module attributes {stable_mosaic.version = 11 : i64} {
  func.func @cnn_affine_kernel(%arg0: i32, %arg1: i32, %arg2: memref<2x1024xf32, #tpu.memory_space<vmem>>, %arg3: memref<1024x1xbf16, #tpu.memory_space<vmem>>, %arg4: memref<1x1xf32, #tpu.memory_space<vmem>>, %arg5: memref<2x1xf32, #tpu.memory_space<vmem>>, %arg6: memref<2x1xf32, #tpu.memory_space<vmem>>) attributes {dimension_semantics = [#tpu.dimension_semantics<parallel>, #tpu.dimension_semantics<arbitrary>], iteration_bounds = array<i64: 1, 1>, scalar_prefetch = 0 : i64, scratch_operands = 1 : i64, tpu.core_type = #tpu.core_type<tc>, window_params = [{transform_indices = @transform_0, window_bounds = array<i64: 2, 1024>}, {transform_indices = @transform_1, window_bounds = array<i64: 1024, 1>}, {pipeline_mode = #tpu.pipeline_mode<synchronous>, transform_indices = @transform_2, window_bounds = array<i64: 1, 1>}, {transform_indices = @transform_3, window_bounds = array<i64: 2, 1>}]} {
    %c0_i32 = arith.constant 0 : i32
    %0 = arith.cmpi eq, %arg1, %c0_i32 : i32
    %1 = arith.extui %0 : i1 to i32
    %c0_i32_0 = arith.constant 0 : i32
    %2 = arith.cmpi ne, %1, %c0_i32_0 : i32
    scf.if %2 {
      %cst_10 = arith.constant 0.000000e+00 : f32
      %13 = vector.broadcast %cst_10 : f32 to vector<2x1xf32>
      %c0_11 = arith.constant 0 : index
      %c0_12 = arith.constant 0 : index
      %14 = vector.load %arg6[%c0_11, %c0_12] : memref<2x1xf32, #tpu.memory_space<vmem>>, vector<2x1xf32>
      tpu.vector_store %arg6[%c0_11, %c0_12], %13 {strides = array<i32>} : memref<2x1xf32, #tpu.memory_space<vmem>>, vector<2x1xf32>,
    } else {
    }
    %c0 = arith.constant 0 : index
    %c0_1 = arith.constant 0 : index
    %3 = vector.load %arg2[%c0, %c0_1] : memref<2x1024xf32, #tpu.memory_space<vmem>>, vector<2x1024xf32>
    %4 = arith.truncf %3 : vector<2x1024xf32> to vector<2x1024xbf16>
    %c0_2 = arith.constant 0 : index
    %c0_3 = arith.constant 0 : index
    %5 = vector.load %arg6[%c0_2, %c0_3] : memref<2x1xf32, #tpu.memory_space<vmem>>, vector<2x1xf32>
    %c0_4 = arith.constant 0 : index
    %c0_5 = arith.constant 0 : index
    %6 = vector.load %arg3[%c0_4, %c0_5] : memref<1024x1xbf16, #tpu.memory_space<vmem>>, vector<1024x1xbf16>
    %cst = arith.constant dense<0.000000e+00> : vector<2x1xf32>
    %7 = tpu.matmul %4, %6, %cst {dimension_numbers = #tpu.dot_dimension_numbers<[1], [0], [0], [1], [0, 0, 1, 1], [], []>} : vector<2x1024xbf16>, vector<1024x1xbf16>, vector<2x1xf32> -> vector<2x1xf32>
    %8 = arith.addf %5, %7 : vector<2x1xf32>
    %c0_6 = arith.constant 0 : index
    %c0_7 = arith.constant 0 : index
    %9 = vector.load %arg6[%c0_6, %c0_7] : memref<2x1xf32, #tpu.memory_space<vmem>>, vector<2x1xf32>
    tpu.vector_store %arg6[%c0_6, %c0_7], %8 {strides = array<i32>} : memref<2x1xf32, #tpu.memory_space<vmem>>, vector<2x1xf32>,
    %c0_i32_8 = arith.constant 0 : i32
    %10 = arith.cmpi eq, %arg1, %c0_i32_8 : i32
    %11 = arith.extui %10 : i1 to i32
    %c0_i32_9 = arith.constant 0 : i32
    %12 = arith.cmpi ne, %11, %c0_i32_9 : i32
    scf.if %12 {
      %c0_10 = arith.constant 0 : index
      %c0_11 = arith.constant 0 : index
      %13 = vector.load %arg6[%c0_10, %c0_11] : memref<2x1xf32, #tpu.memory_space<vmem>>, vector<2x1xf32>
      %c0_12 = arith.constant 0 : index
      %c0_13 = arith.constant 0 : index
      %14 = vector.load %arg4[%c0_12, %c0_13] : memref<1x1xf32, #tpu.memory_space<vmem>>, vector<1x1xf32>
      %15 = vector.broadcast %14 : vector<1x1xf32> to vector<2x1xf32>
      %16 = arith.addf %13, %15 : vector<2x1xf32>
      %c0_14 = arith.constant 0 : index
      %c0_15 = arith.constant 0 : index
      %17 = vector.load %arg5[%c0_14, %c0_15] : memref<2x1xf32, #tpu.memory_space<vmem>>, vector<2x1xf32>
      tpu.vector_store %arg5[%c0_14, %c0_15], %16 {strides = array<i32>} : memref<2x1xf32, #tpu.memory_space<vmem>>, vector<2x1xf32>,
    } else {
    }
    return
  }
  func.func @transform_0(%arg0: i32, %arg1: i32) -> (i32, i32) {
    %c0_i32 = arith.constant 0 : i32
    return %arg0, %arg1 : i32, i32
  }
  func.func @transform_1(%arg0: i32, %arg1: i32) -> (i32, i32) {
    %c0_i32 = arith.constant 0 : i32
    %c0_i32_0 = arith.constant 0 : i32
    return %arg1, %c0_i32 : i32, i32
  }
  func.func @transform_2(%arg0: i32, %arg1: i32) -> (i32, i32) {
    %c0_i32 = arith.constant 0 : i32
    %c0_i32_0 = arith.constant 0 : i32
    %c0_i32_1 = arith.constant 0 : i32
    return %c0_i32, %c0_i32_0 : i32, i32
  }
  func.func @transform_3(%arg0: i32, %arg1: i32) -> (i32, i32) {
    %c0_i32 = arith.constant 0 : i32
    %c0_i32_0 = arith.constant 0 : i32
    return %arg0, %c0_i32 : i32, i32
  }
}

</mosaic_0001>

<llo_original>
// kernel: tpu_custom_call.1
$region0: #{tpu_custom_call.1}
  #allocation0 [shape = 'u32[]', space=smem, size = 0x4, offset = 0x4, fixed_abs, tag = 'smem constant byte address 0x4 - core index']
  #allocation1 [shape = 'u32[144,128]{1,0:T(1,128)}', space=vmem, size = 0x12000, scoped, tag = 'internal scratch']
  #allocation2 [shape = 'f32[2,1]{1,0:T(2,128)}', space=vmem, size = 0x400, scoped, tag = 'scratch operand']
  #allocation3 [shape = 'f32[1,1]{1,0:T(1,128)S(1)}', space=vmem, size = 0x200, scoped, tag = 'scoped memory for tpu_custom_call.1']
  %s0 = inlined_call_operand.vmem [shape: f32[2,1024], index: 0, kind: input, shape index: {}]
  %s1 = inlined_call_operand.vmem [shape: bf16[1024,1], index: 1, kind: input, shape index: {}]
  %s2 = inlined_call_operand.<no memory space> [shape: f32[1,1], index: 2, kind: input, shape index: {}]
  %s3 = inlined_call_operand.vmem [shape: f32[2,1], index: 3, kind: output, shape index: {}]
  %s4 = sld [smem:[#allocation0]]
  $region30: #{tpu_custom_call.1} parent=0
    _
  %s6 = ssub.s32 1, %s4
  %s7 = scalar_select 0, %s6, %s4
  %v8 = vstv %s2
  %9 = vst [vmem:[#allocation3] sm:$0x1] %v8
  // Predicated region
  $region2: #{tpu_custom_call.1} parent=0 // pred_check
    _
  $region3: #{tpu_custom_call.1} parent=0 // pred_check_branch
    %11 = sbr.rel (0) target = $region5
  $region4: #{tpu_custom_call.1} parent=0 // pred_region
    _
  $region5: #{tpu_custom_call.1} parent=0 // pred_fallthru
    _
  // Predicated region
  $region6: #{tpu_custom_call.1} parent=0 // pred_check
    _
  $region7: #{tpu_custom_call.1} parent=0 // pred_check_branch
    %13 = sbr.rel (0) target = $region9
  $region8: #{tpu_custom_call.1} parent=0 // pred_region
    _
  $region9: #{tpu_custom_call.1} parent=0 // pred_fallthru
    _
  // Predicated region
  $region10: #{tpu_custom_call.1} parent=0 // pred_check
    _
  $region11: #{tpu_custom_call.1} parent=0 // pred_check_branch
    %15 = sbr.rel (0) target = $region13
  $region12: #{tpu_custom_call.1} parent=0 // pred_region
    _
  $region13: #{tpu_custom_call.1} parent=0 // pred_fallthru
    _
  %p17 = scmp.eq.s32.totalorder 0, 0
  // Predicated region
  $region14: #{tpu_custom_call.1} parent=0 // pred_check
    %p18 = pneg %p17
  $region15: #{tpu_custom_call.1} parent=0 // pred_check_branch
    %20 = sbr.rel (%p18) target = $region17
  $region16: #{tpu_custom_call.1} parent=0 // pred_region
    %vm21 = vcmask 1024
    %22 = vst.msk [vmem:[#allocation2] sm:$0x3] %vm21, 0.0
  $region17: #{tpu_custom_call.1} parent=0 // pred_fallthru
    _
  %v23 = vld [vmem:[%s0] sm:$0xff]
  %v24 = vld [vmem:[%s0 + $0x8] sm:$0xff]
  %v27 = vcombine.high %v23, %v23
  %v29 = vunpack.c.l.s4 1983009808
  %v30 = vunpack.c.0.s8 %v29
  %v31 = vlaneseq
  %v32 = vshrl.u32 %v31, 7
  %v33 = vsub.s32 %v30, %v32
  %v34 = vrot.slane %v23, %v33
  %v36 = vunpack.c.l.s4 1983009808
  %v37 = vunpack.c.0.s8 %v36
  %v38 = vlaneseq
  %v39 = vshrl.u32 %v38, 7
  %v40 = vsub.s32 %v37, %v39
  %v41 = vrot.slane %v27, %v40
  %v42 = vcombine.high %v34, %v34
  %v43 = vcombine.high %v41, %v41
  %v44 = vcombine.high %v24, %v24
  %v46 = vunpack.c.l.s4 1983009808
  %v47 = vunpack.c.0.s8 %v46
  %v48 = vlaneseq
  %v49 = vshrl.u32 %v48, 7
  %v50 = vsub.s32 %v47, %v49
  %v51 = vrot.slane %v24, %v50
  %v53 = vunpack.c.l.s4 1983009808
  %v54 = vunpack.c.0.s8 %v53
  %v55 = vlaneseq
  %v56 = vshrl.u32 %v55, 7
  %v57 = vsub.s32 %v54, %v56
  %v58 = vrot.slane %v44, %v57
  %v59 = vcombine.high %v51, %v51
  %v60 = vcombine.high %v58, %v58
  %v69 = vpack.c.bf16 %v34, %v34
  %v70 = vpack.c.bf16 %v42, %v42
  %v71 = vpack.c.bf16 %v41, %v41
  %v72 = vpack.c.bf16 %v43, %v43
  %v73 = vpack.c.bf16 %v51, %v51
  %v74 = vpack.c.bf16 %v59, %v59
  %v75 = vpack.c.bf16 %v58, %v58
  %v76 = vpack.c.bf16 %v60, %v60
  %v77 = vld [vmem:[#allocation2] sm:$0x3]
  %v78 = vld [vmem:[%s1] sm:$0xf]
  %v79 = vld [vmem:[%s1 + $0x4] sm:$0xf]
  %v80 = vld [vmem:[%s1 + $0x8] sm:$0xf]
  %v81 = vld [vmem:[%s1 + $0xc] sm:$0xf]
  %v82 = vld [vmem:[%s1 + $0x10] sm:$0xf]
  %v83 = vld [vmem:[%s1 + $0x14] sm:$0xf]
  %v84 = vld [vmem:[%s1 + $0x18] sm:$0xf]
  %v85 = vld [vmem:[%s1 + $0x1c] sm:$0xf]
  %v86 = vld [vmem:[%s1 + $0x20] sm:$0xf]
  %v87 = vld [vmem:[%s1 + $0x24] sm:$0xf]
  %v88 = vld [vmem:[%s1 + $0x28] sm:$0xf]
  %v89 = vld [vmem:[%s1 + $0x2c] sm:$0xf]
  %v90 = vld [vmem:[%s1 + $0x30] sm:$0xf]
  %v91 = vld [vmem:[%s1 + $0x34] sm:$0xf]
  %v92 = vld [vmem:[%s1 + $0x38] sm:$0xf]
  %v93 = vld [vmem:[%s1 + $0x3c] sm:$0xf]
  %v94 = vld [vmem:[%s1 + $0x40] sm:$0xf]
  %v95 = vld [vmem:[%s1 + $0x44] sm:$0xf]
  %v96 = vld [vmem:[%s1 + $0x48] sm:$0xf]
  %v97 = vld [vmem:[%s1 + $0x4c] sm:$0xf]
  %v98 = vld [vmem:[%s1 + $0x50] sm:$0xf]
  %v99 = vld [vmem:[%s1 + $0x54] sm:$0xf]
  %v100 = vld [vmem:[%s1 + $0x58] sm:$0xf]
  %v101 = vld [vmem:[%s1 + $0x5c] sm:$0xf]
  %v102 = vld [vmem:[%s1 + $0x60] sm:$0xf]
  %v103 = vld [vmem:[%s1 + $0x64] sm:$0xf]
  %v104 = vld [vmem:[%s1 + $0x68] sm:$0xf]
  %v105 = vld [vmem:[%s1 + $0x6c] sm:$0xf]
  %v106 = vld [vmem:[%s1 + $0x70] sm:$0xf]
  %v107 = vld [vmem:[%s1 + $0x74] sm:$0xf]
  %v108 = vld [vmem:[%s1 + $0x78] sm:$0xf]
  %v109 = vld [vmem:[%s1 + $0x7c] sm:$0xf]
  %v110 = vld [vmem:[%s1 + $0x80] sm:$0xf]
  %v111 = vld [vmem:[%s1 + $0x84] sm:$0xf]
  %v112 = vld [vmem:[%s1 + $0x88] sm:$0xf]
  %v113 = vld [vmem:[%s1 + $0x8c] sm:$0xf]
  %v114 = vld [vmem:[%s1 + $0x90] sm:$0xf]
  %v115 = vld [vmem:[%s1 + $0x94] sm:$0xf]
  %v116 = vld [vmem:[%s1 + $0x98] sm:$0xf]
  %v117 = vld [vmem:[%s1 + $0x9c] sm:$0xf]
  %v118 = vld [vmem:[%s1 + $0xa0] sm:$0xf]
  %v119 = vld [vmem:[%s1 + $0xa4] sm:$0xf]
  %v120 = vld [vmem:[%s1 + $0xa8] sm:$0xf]
  %v121 = vld [vmem:[%s1 + $0xac] sm:$0xf]
  %v122 = vld [vmem:[%s1 + $0xb0] sm:$0xf]
  %v123 = vld [vmem:[%s1 + $0xb4] sm:$0xf]
  %v124 = vld [vmem:[%s1 + $0xb8] sm:$0xf]
  %v125 = vld [vmem:[%s1 + $0xbc] sm:$0xf]
  %v126 = vld [vmem:[%s1 + $0xc0] sm:$0xf]
  %v127 = vld [vmem:[%s1 + $0xc4] sm:$0xf]
  %v128 = vld [vmem:[%s1 + $0xc8] sm:$0xf]
  %v129 = vld [vmem:[%s1 + $0xcc] sm:$0xf]
  %v130 = vld [vmem:[%s1 + $0xd0] sm:$0xf]
  %v131 = vld [vmem:[%s1 + $0xd4] sm:$0xf]
  %v132 = vld [vmem:[%s1 + $0xd8] sm:$0xf]
  %v133 = vld [vmem:[%s1 + $0xdc] sm:$0xf]
  %v134 = vld [vmem:[%s1 + $0xe0] sm:$0xf]
  %v135 = vld [vmem:[%s1 + $0xe4] sm:$0xf]
  %v136 = vld [vmem:[%s1 + $0xe8] sm:$0xf]
  %v137 = vld [vmem:[%s1 + $0xec] sm:$0xf]
  %v138 = vld [vmem:[%s1 + $0xf0] sm:$0xf]
  %v139 = vld [vmem:[%s1 + $0xf4] sm:$0xf]
  %v140 = vld [vmem:[%s1 + $0xf8] sm:$0xf]
  %v141 = vld [vmem:[%s1 + $0xfc] sm:$0xf]
  %v142 = vld [vmem:[%s1 + $0x100] sm:$0xf]
  %v143 = vld [vmem:[%s1 + $0x104] sm:$0xf]
  %v144 = vld [vmem:[%s1 + $0x108] sm:$0xf]
  %v145 = vld [vmem:[%s1 + $0x10c] sm:$0xf]
  %v146 = vld [vmem:[%s1 + $0x110] sm:$0xf]
  %v147 = vld [vmem:[%s1 + $0x114] sm:$0xf]
  %v148 = vld [vmem:[%s1 + $0x118] sm:$0xf]
  %v149 = vld [vmem:[%s1 + $0x11c] sm:$0xf]
  %v150 = vld [vmem:[%s1 + $0x120] sm:$0xf]
  %v151 = vld [vmem:[%s1 + $0x124] sm:$0xf]
  %v152 = vld [vmem:[%s1 + $0x128] sm:$0xf]
  %v153 = vld [vmem:[%s1 + $0x12c] sm:$0xf]
  %v154 = vld [vmem:[%s1 + $0x130] sm:$0xf]
  %v155 = vld [vmem:[%s1 + $0x134] sm:$0xf]
  %v156 = vld [vmem:[%s1 + $0x138] sm:$0xf]
  %v157 = vld [vmem:[%s1 + $0x13c] sm:$0xf]
  %v158 = vld [vmem:[%s1 + $0x140] sm:$0xf]
  %v159 = vld [vmem:[%s1 + $0x144] sm:$0xf]
  %v160 = vld [vmem:[%s1 + $0x148] sm:$0xf]
  %v161 = vld [vmem:[%s1 + $0x14c] sm:$0xf]
  %v162 = vld [vmem:[%s1 + $0x150] sm:$0xf]
  %v163 = vld [vmem:[%s1 + $0x154] sm:$0xf]
  %v164 = vld [vmem:[%s1 + $0x158] sm:$0xf]
  %v165 = vld [vmem:[%s1 + $0x15c] sm:$0xf]
  %v166 = vld [vmem:[%s1 + $0x160] sm:$0xf]
  %v167 = vld [vmem:[%s1 + $0x164] sm:$0xf]
  %v168 = vld [vmem:[%s1 + $0x168] sm:$0xf]
  %v169 = vld [vmem:[%s1 + $0x16c] sm:$0xf]
  %v170 = vld [vmem:[%s1 + $0x170] sm:$0xf]
  %v171 = vld [vmem:[%s1 + $0x174] sm:$0xf]
  %v172 = vld [vmem:[%s1 + $0x178] sm:$0xf]
  %v173 = vld [vmem:[%s1 + $0x17c] sm:$0xf]
  %v174 = vld [vmem:[%s1 + $0x180] sm:$0xf]
  %v175 = vld [vmem:[%s1 + $0x184] sm:$0xf]
  %v176 = vld [vmem:[%s1 + $0x188] sm:$0xf]
  %v177 = vld [vmem:[%s1 + $0x18c] sm:$0xf]
  %v178 = vld [vmem:[%s1 + $0x190] sm:$0xf]
  %v179 = vld [vmem:[%s1 + $0x194] sm:$0xf]
  %v180 = vld [vmem:[%s1 + $0x198] sm:$0xf]
  %v181 = vld [vmem:[%s1 + $0x19c] sm:$0xf]
  %v182 = vld [vmem:[%s1 + $0x1a0] sm:$0xf]
  %v183 = vld [vmem:[%s1 + $0x1a4] sm:$0xf]
  %v184 = vld [vmem:[%s1 + $0x1a8] sm:$0xf]
  %v185 = vld [vmem:[%s1 + $0x1ac] sm:$0xf]
  %v186 = vld [vmem:[%s1 + $0x1b0] sm:$0xf]
  %v187 = vld [vmem:[%s1 + $0x1b4] sm:$0xf]
  %v188 = vld [vmem:[%s1 + $0x1b8] sm:$0xf]
  %v189 = vld [vmem:[%s1 + $0x1bc] sm:$0xf]
  %v190 = vld [vmem:[%s1 + $0x1c0] sm:$0xf]
  %v191 = vld [vmem:[%s1 + $0x1c4] sm:$0xf]
  %v192 = vld [vmem:[%s1 + $0x1c8] sm:$0xf]
  %v193 = vld [vmem:[%s1 + $0x1cc] sm:$0xf]
  %v194 = vld [vmem:[%s1 + $0x1d0] sm:$0xf]
  %v195 = vld [vmem:[%s1 + $0x1d4] sm:$0xf]
  %v196 = vld [vmem:[%s1 + $0x1d8] sm:$0xf]
  %v197 = vld [vmem:[%s1 + $0x1dc] sm:$0xf]
  %v198 = vld [vmem:[%s1 + $0x1e0] sm:$0xf]
  %v199 = vld [vmem:[%s1 + $0x1e4] sm:$0xf]
  %v200 = vld [vmem:[%s1 + $0x1e8] sm:$0xf]
  %v201 = vld [vmem:[%s1 + $0x1ec] sm:$0xf]
  %v202 = vld [vmem:[%s1 + $0x1f0] sm:$0xf]
  %v203 = vld [vmem:[%s1 + $0x1f4] sm:$0xf]
  %v204 = vld [vmem:[%s1 + $0x1f8] sm:$0xf]
  %v205 = vld [vmem:[%s1 + $0x1fc] sm:$0xf]
  %v334 = vunpack.c.l.b16 %v78
  %v335 = vunpack.c.l.b16 %v79
  %v336 = vunpack.c.l.b16 %v80
  %v337 = vunpack.c.l.b16 %v81
  %v338 = vunpack.c.l.b16 %v82
  %v339 = vunpack.c.l.b16 %v83
  %v340 = vunpack.c.l.b16 %v84
  %v341 = vunpack.c.l.b16 %v85
  %v342 = vunpack.c.l.b16 %v86
  %v343 = vunpack.c.l.b16 %v87
  %v344 = vunpack.c.l.b16 %v88
  %v345 = vunpack.c.l.b16 %v89
  %v346 = vunpack.c.l.b16 %v90
  %v347 = vunpack.c.l.b16 %v91
  %v348 = vunpack.c.l.b16 %v92
  %v349 = vunpack.c.l.b16 %v93
  %v350 = vunpack.c.l.b16 %v94
  %v351 = vunpack.c.l.b16 %v95
  %v352 = vunpack.c.l.b16 %v96
  %v353 = vunpack.c.l.b16 %v97
  %v354 = vunpack.c.l.b16 %v98
  %v355 = vunpack.c.l.b16 %v99
  %v356 = vunpack.c.l.b16 %v100
  %v357 = vunpack.c.l.b16 %v101
  %v358 = vunpack.c.l.b16 %v102
  %v359 = vunpack.c.l.b16 %v103
  %v360 = vunpack.c.l.b16 %v104
  %v361 = vunpack.c.l.b16 %v105
  %v362 = vunpack.c.l.b16 %v106
  %v363 = vunpack.c.l.b16 %v107
  %v364 = vunpack.c.l.b16 %v108
  %v365 = vunpack.c.l.b16 %v109
  %v366 = vunpack.c.l.b16 %v110
  %v367 = vunpack.c.l.b16 %v111
  %v368 = vunpack.c.l.b16 %v112
  %v369 = vunpack.c.l.b16 %v113
  %v370 = vunpack.c.l.b16 %v114
  %v371 = vunpack.c.l.b16 %v115
  %v372 = vunpack.c.l.b16 %v116
  %v373 = vunpack.c.l.b16 %v117
  %v374 = vunpack.c.l.b16 %v118
  %v375 = vunpack.c.l.b16 %v119
  %v376 = vunpack.c.l.b16 %v120
  %v377 = vunpack.c.l.b16 %v121
  %v378 = vunpack.c.l.b16 %v122
  %v379 = vunpack.c.l.b16 %v123
  %v380 = vunpack.c.l.b16 %v124
  %v381 = vunpack.c.l.b16 %v125
  %v382 = vunpack.c.l.b16 %v126
  %v383 = vunpack.c.l.b16 %v127
  %v384 = vunpack.c.l.b16 %v128
  %v385 = vunpack.c.l.b16 %v129
  %v386 = vunpack.c.l.b16 %v130
  %v387 = vunpack.c.l.b16 %v131
  %v388 = vunpack.c.l.b16 %v132
  %v389 = vunpack.c.l.b16 %v133
  %v390 = vunpack.c.l.b16 %v134
  %v391 = vunpack.c.l.b16 %v135
  %v392 = vunpack.c.l.b16 %v136
  %v393 = vunpack.c.l.b16 %v137
  %v394 = vunpack.c.l.b16 %v138
  %v395 = vunpack.c.l.b16 %v139
  %v396 = vunpack.c.l.b16 %v140
  %v397 = vunpack.c.l.b16 %v141
  %v398 = vunpack.c.l.b16 %v142
  %v399 = vunpack.c.l.b16 %v143
  %v400 = vunpack.c.l.b16 %v144
  %v401 = vunpack.c.l.b16 %v145
  %v402 = vunpack.c.l.b16 %v146
  %v403 = vunpack.c.l.b16 %v147
  %v404 = vunpack.c.l.b16 %v148
  %v405 = vunpack.c.l.b16 %v149
  %v406 = vunpack.c.l.b16 %v150
  %v407 = vunpack.c.l.b16 %v151
  %v408 = vunpack.c.l.b16 %v152
  %v409 = vunpack.c.l.b16 %v153
  %v410 = vunpack.c.l.b16 %v154
  %v411 = vunpack.c.l.b16 %v155
  %v412 = vunpack.c.l.b16 %v156
  %v413 = vunpack.c.l.b16 %v157
  %v414 = vunpack.c.l.b16 %v158
  %v415 = vunpack.c.l.b16 %v159
  %v416 = vunpack.c.l.b16 %v160
  %v417 = vunpack.c.l.b16 %v161
  %v418 = vunpack.c.l.b16 %v162
  %v419 = vunpack.c.l.b16 %v163
  %v420 = vunpack.c.l.b16 %v164
  %v421 = vunpack.c.l.b16 %v165
  %v422 = vunpack.c.l.b16 %v166
  %v423 = vunpack.c.l.b16 %v167
  %v424 = vunpack.c.l.b16 %v168
  %v425 = vunpack.c.l.b16 %v169
  %v426 = vunpack.c.l.b16 %v170
  %v427 = vunpack.c.l.b16 %v171
  %v428 = vunpack.c.l.b16 %v172
  %v429 = vunpack.c.l.b16 %v173
  %v430 = vunpack.c.l.b16 %v174
  %v431 = vunpack.c.l.b16 %v175
  %v432 = vunpack.c.l.b16 %v176
  %v433 = vunpack.c.l.b16 %v177
  %v434 = vunpack.c.l.b16 %v178
  %v435 = vunpack.c.l.b16 %v179
  %v436 = vunpack.c.l.b16 %v180
  %v437 = vunpack.c.l.b16 %v181
  %v438 = vunpack.c.l.b16 %v182
  %v439 = vunpack.c.l.b16 %v183
  %v440 = vunpack.c.l.b16 %v184
  %v441 = vunpack.c.l.b16 %v185
  %v442 = vunpack.c.l.b16 %v186
  %v443 = vunpack.c.l.b16 %v187
  %v444 = vunpack.c.l.b16 %v188
  %v445 = vunpack.c.l.b16 %v189
  %v446 = vunpack.c.l.b16 %v190
  %v447 = vunpack.c.l.b16 %v191
  %v448 = vunpack.c.l.b16 %v192
  %v449 = vunpack.c.l.b16 %v193
  %v450 = vunpack.c.l.b16 %v194
  %v451 = vunpack.c.l.b16 %v195
  %v452 = vunpack.c.l.b16 %v196
  %v453 = vunpack.c.l.b16 %v197
  %v454 = vunpack.c.l.b16 %v198
  %v455 = vunpack.c.l.b16 %v199
  %v456 = vunpack.c.l.b16 %v200
  %v457 = vunpack.c.l.b16 %v201
  %v458 = vunpack.c.l.b16 %v202
  %v459 = vunpack.c.l.b16 %v203
  %v460 = vunpack.c.l.b16 %v204
  %v461 = vunpack.c.l.b16 %v205
  %v462 = vpack.c.b16 %v335, %v334
  %v463 = vpack.c.b16 %v337, %v336
  %v464 = vpack.c.b16 %v339, %v338
  %v465 = vpack.c.b16 %v341, %v340
  %v466 = vpack.c.b16 %v343, %v342
  %v467 = vpack.c.b16 %v345, %v344
  %v468 = vpack.c.b16 %v347, %v346
  %v469 = vpack.c.b16 %v349, %v348
  %v470 = vpack.c.b16 %v351, %v350
  %v471 = vpack.c.b16 %v353, %v352
  %v472 = vpack.c.b16 %v355, %v354
  %v473 = vpack.c.b16 %v357, %v356
  %v474 = vpack.c.b16 %v359, %v358
  %v475 = vpack.c.b16 %v361, %v360
  %v476 = vpack.c.b16 %v363, %v362
  %v477 = vpack.c.b16 %v365, %v364
  %v478 = vpack.c.b16 %v367, %v366
  %v479 = vpack.c.b16 %v369, %v368
  %v480 = vpack.c.b16 %v371, %v370
  %v481 = vpack.c.b16 %v373, %v372
  %v482 = vpack.c.b16 %v375, %v374
  %v483 = vpack.c.b16 %v377, %v376
  %v484 = vpack.c.b16 %v379, %v378
  %v485 = vpack.c.b16 %v381, %v380
  %v486 = vpack.c.b16 %v383, %v382
  %v487 = vpack.c.b16 %v385, %v384
  %v488 = vpack.c.b16 %v387, %v386
  %v489 = vpack.c.b16 %v389, %v388
  %v490 = vpack.c.b16 %v391, %v390
  %v491 = vpack.c.b16 %v393, %v392
  %v492 = vpack.c.b16 %v395, %v394
  %v493 = vpack.c.b16 %v397, %v396
  %v494 = vpack.c.b16 %v399, %v398
  %v495 = vpack.c.b16 %v401, %v400
  %v496 = vpack.c.b16 %v403, %v402
  %v497 = vpack.c.b16 %v405, %v404
  %v498 = vpack.c.b16 %v407, %v406
  %v499 = vpack.c.b16 %v409, %v408
  %v500 = vpack.c.b16 %v411, %v410
  %v501 = vpack.c.b16 %v413, %v412
  %v502 = vpack.c.b16 %v415, %v414
  %v503 = vpack.c.b16 %v417, %v416
  %v504 = vpack.c.b16 %v419, %v418
  %v505 = vpack.c.b16 %v421, %v420
  %v506 = vpack.c.b16 %v423, %v422
  %v507 = vpack.c.b16 %v425, %v424
  %v508 = vpack.c.b16 %v427, %v426
  %v509 = vpack.c.b16 %v429, %v428
  %v510 = vpack.c.b16 %v431, %v430
  %v511 = vpack.c.b16 %v433, %v432
  %v512 = vpack.c.b16 %v435, %v434
  %v513 = vpack.c.b16 %v437, %v436
  %v514 = vpack.c.b16 %v439, %v438
  %v515 = vpack.c.b16 %v441, %v440
  %v516 = vpack.c.b16 %v443, %v442
  %v517 = vpack.c.b16 %v445, %v444
  %v518 = vpack.c.b16 %v447, %v446
  %v519 = vpack.c.b16 %v449, %v448
  %v520 = vpack.c.b16 %v451, %v450
  %v521 = vpack.c.b16 %v453, %v452
  %v522 = vpack.c.b16 %v455, %v454
  %v523 = vpack.c.b16 %v457, %v456
  %v524 = vpack.c.b16 %v459, %v458
  %v525 = vpack.c.b16 %v461, %v460
  %590 = vmatprep.subr.bf16.mxu0 0
  %591 = vmatpush1.bf16.msra.mxu0 %v462
  %592 = vmatprep.subr.bf16.mxu0 0
  %593 = vmatpush1.bf16.msra.mxu0 %v463
  %594 = vmatprep.subr.bf16.mxu0 0
  %595 = vmatpush1.bf16.msra.mxu0 %v464
  %596 = vmatprep.subr.bf16.mxu0 0
  %597 = vmatpush1.bf16.msra.mxu0 %v465
  %598 = vmatprep.subr.bf16.mxu0 0
  %599 = vmatpush1.bf16.msra.mxu0 %v466
  %600 = vmatprep.subr.bf16.mxu0 0
  %601 = vmatpush1.bf16.msra.mxu0 %v467
  %602 = vmatprep.subr.bf16.mxu0 0
  %603 = vmatpush1.bf16.msra.mxu0 %v468
  %604 = vmatprep.subr.bf16.mxu0 0
  %605 = vmatpush1.bf16.msra.mxu0 %v469
  %606 = vmatprep.subr.bf16.mxu0 0
  %607 = vmatpush1.bf16.msra.mxu0 %v470
  %608 = vmatprep.subr.bf16.mxu0 0
  %609 = vmatpush1.bf16.msra.mxu0 %v471
  %610 = vmatprep.subr.bf16.mxu0 0
  %611 = vmatpush1.bf16.msra.mxu0 %v472
  %612 = vmatprep.subr.bf16.mxu0 0
  %613 = vmatpush1.bf16.msra.mxu0 %v473
  %614 = vmatprep.subr.bf16.mxu0 0
  %615 = vmatpush1.bf16.msra.mxu0 %v474
  %616 = vmatprep.subr.bf16.mxu0 0
  %617 = vmatpush1.bf16.msra.mxu0 %v475
  %618 = vmatprep.subr.bf16.mxu0 0
  %619 = vmatpush1.bf16.msra.mxu0 %v476
  %620 = vmatprep.subr.bf16.mxu0 0
  %621 = vmatpush1.bf16.msra.mxu0 %v477
  %622 = vmatprep.mubr.bf16.mxu0 %v70
  %623 = vmatmul.mubr.bf16.gmra.mrb[0].mxu0 %v69
  %v624 = vpop.f32.mrb[0].mxu0
  %v625 = vadd.f32 0.0, %v624
  %v626 = vpop.f32.mrb[0].mxu0
  %v627 = vpop.f32.mrb[0].mxu0
  %v628 = vpop.f32.mrb[0].mxu0
  %629 = vdwg.mxu0
  %630 = vmatprep.subr.bf16.mxu0 0
  %631 = vmatpush1.bf16.msra.mxu0 %v478
  %632 = vmatprep.subr.bf16.mxu0 0
  %633 = vmatpush1.bf16.msra.mxu0 %v479
  %634 = vmatprep.subr.bf16.mxu0 0
  %635 = vmatpush1.bf16.msra.mxu0 %v480
  %636 = vmatprep.subr.bf16.mxu0 0
  %637 = vmatpush1.bf16.msra.mxu0 %v481
  %638 = vmatprep.subr.bf16.mxu0 0
  %639 = vmatpush1.bf16.msra.mxu0 %v482
  %640 = vmatprep.subr.bf16.mxu0 0
  %641 = vmatpush1.bf16.msra.mxu0 %v483
  %642 = vmatprep.subr.bf16.mxu0 0
  %643 = vmatpush1.bf16.msra.mxu0 %v484
  %644 = vmatprep.subr.bf16.mxu0 0
  %645 = vmatpush1.bf16.msra.mxu0 %v485
  %646 = vmatprep.subr.bf16.mxu0 0
  %647 = vmatpush1.bf16.msra.mxu0 %v486
  %648 = vmatprep.subr.bf16.mxu0 0
  %649 = vmatpush1.bf16.msra.mxu0 %v487
  %650 = vmatprep.subr.bf16.mxu0 0
  %651 = vmatpush1.bf16.msra.mxu0 %v488
  %652 = vmatprep.subr.bf16.mxu0 0
  %653 = vmatpush1.bf16.msra.mxu0 %v489
  %654 = vmatprep.subr.bf16.mxu0 0
  %655 = vmatpush1.bf16.msra.mxu0 %v490
  %656 = vmatprep.subr.bf16.mxu0 0
  %657 = vmatpush1.bf16.msra.mxu0 %v491
  %658 = vmatprep.subr.bf16.mxu0 0
  %659 = vmatpush1.bf16.msra.mxu0 %v492
  %660 = vmatprep.subr.bf16.mxu0 0
  %661 = vmatpush1.bf16.msra.mxu0 %v493
  %662 = vmatprep.mubr.bf16.mxu0 %v72
  %663 = vmatmul.mubr.bf16.gmra.mrb[0].mxu0 %v71
  %v664 = vpop.f32.mrb[0].mxu0
  %v665 = vadd.f32 %v625, %v664
  %v666 = vpop.f32.mrb[0].mxu0
  %v667 = vpop.f32.mrb[0].mxu0
  %v668 = vpop.f32.mrb[0].mxu0
  %669 = vdwg.mxu0
  %670 = vmatprep.subr.bf16.mxu0 0
  %671 = vmatpush1.bf16.msra.mxu0 %v494
  %672 = vmatprep.subr.bf16.mxu0 0
  %673 = vmatpush1.bf16.msra.mxu0 %v495
  %674 = vmatprep.subr.bf16.mxu0 0
  %675 = vmatpush1.bf16.msra.mxu0 %v496
  %676 = vmatprep.subr.bf16.mxu0 0
  %677 = vmatpush1.bf16.msra.mxu0 %v497
  %678 = vmatprep.subr.bf16.mxu0 0
  %679 = vmatpush1.bf16.msra.mxu0 %v498
  %680 = vmatprep.subr.bf16.mxu0 0
  %681 = vmatpush1.bf16.msra.mxu0 %v499
  %682 = vmatprep.subr.bf16.mxu0 0
  %683 = vmatpush1.bf16.msra.mxu0 %v500
  %684 = vmatprep.subr.bf16.mxu0 0
  %685 = vmatpush1.bf16.msra.mxu0 %v501
  %686 = vmatprep.subr.bf16.mxu0 0
  %687 = vmatpush1.bf16.msra.mxu0 %v502
  %688 = vmatprep.subr.bf16.mxu0 0
  %689 = vmatpush1.bf16.msra.mxu0 %v503
  %690 = vmatprep.subr.bf16.mxu0 0
  %691 = vmatpush1.bf16.msra.mxu0 %v504
  %692 = vmatprep.subr.bf16.mxu0 0
  %693 = vmatpush1.bf16.msra.mxu0 %v505
  %694 = vmatprep.subr.bf16.mxu0 0
  %695 = vmatpush1.bf16.msra.mxu0 %v506
  %696 = vmatprep.subr.bf16.mxu0 0
  %697 = vmatpush1.bf16.msra.mxu0 %v507
  %698 = vmatprep.subr.bf16.mxu0 0
  %699 = vmatpush1.bf16.msra.mxu0 %v508
  %700 = vmatprep.subr.bf16.mxu0 0
  %701 = vmatpush1.bf16.msra.mxu0 %v509
  %702 = vmatprep.mubr.bf16.mxu0 %v74
  %703 = vmatmul.mubr.bf16.gmra.mrb[0].mxu0 %v73
  %v704 = vpop.f32.mrb[0].mxu0
  %v705 = vadd.f32 %v665, %v704
  %v706 = vpop.f32.mrb[0].mxu0
  %v707 = vpop.f32.mrb[0].mxu0
  %v708 = vpop.f32.mrb[0].mxu0
  %709 = vdwg.mxu0
  %710 = vmatprep.subr.bf16.mxu0 0
  %711 = vmatpush1.bf16.msra.mxu0 %v510
  %712 = vmatprep.subr.bf16.mxu0 0
  %713 = vmatpush1.bf16.msra.mxu0 %v511
  %714 = vmatprep.subr.bf16.mxu0 0
  %715 = vmatpush1.bf16.msra.mxu0 %v512
  %716 = vmatprep.subr.bf16.mxu0 0
  %717 = vmatpush1.bf16.msra.mxu0 %v513
  %718 = vmatprep.subr.bf16.mxu0 0
  %719 = vmatpush1.bf16.msra.mxu0 %v514
  %720 = vmatprep.subr.bf16.mxu0 0
  %721 = vmatpush1.bf16.msra.mxu0 %v515
  %722 = vmatprep.subr.bf16.mxu0 0
  %723 = vmatpush1.bf16.msra.mxu0 %v516
  %724 = vmatprep.subr.bf16.mxu0 0
  %725 = vmatpush1.bf16.msra.mxu0 %v517
  %726 = vmatprep.subr.bf16.mxu0 0
  %727 = vmatpush1.bf16.msra.mxu0 %v518
  %728 = vmatprep.subr.bf16.mxu0 0
  %729 = vmatpush1.bf16.msra.mxu0 %v519
  %730 = vmatprep.subr.bf16.mxu0 0
  %731 = vmatpush1.bf16.msra.mxu0 %v520
  %732 = vmatprep.subr.bf16.mxu0 0
  %733 = vmatpush1.bf16.msra.mxu0 %v521
  %734 = vmatprep.subr.bf16.mxu0 0
  %735 = vmatpush1.bf16.msra.mxu0 %v522
  %736 = vmatprep.subr.bf16.mxu0 0
  %737 = vmatpush1.bf16.msra.mxu0 %v523
  %738 = vmatprep.subr.bf16.mxu0 0
  %739 = vmatpush1.bf16.msra.mxu0 %v524
  %740 = vmatprep.subr.bf16.mxu0 0
  %741 = vmatpush1.bf16.msra.mxu0 %v525
  %742 = vmatprep.mubr.bf16.mxu0 %v76
  %743 = vmatmul.mubr.bf16.gmra.mrb[0].mxu0 %v75
  %v744 = vpop.f32.mrb[0].mxu0
  %v745 = vadd.f32 %v705, %v744
  %v746 = vpop.f32.mrb[0].mxu0
  %v747 = vpop.f32.mrb[0].mxu0
  %v748 = vpop.f32.mrb[0].mxu0
  %749 = vdwg.mxu0
  %v750 = vadd.f32 %v77, %v745
  %vm751 = vcmask 1024
  %752 = vst.msk [vmem:[#allocation2] sm:$0x3] %vm751, %v750
  // Predicated region
  $region18: #{tpu_custom_call.1} parent=0 // pred_check
    %p753 = pneg %p17
  $region19: #{tpu_custom_call.1} parent=0 // pred_check_branch
    %755 = sbr.rel (%p753) target = $region21
  $region20: #{tpu_custom_call.1} parent=0 // pred_region
    %v756 = vld [vmem:[#allocation2] sm:$0x3]
    %v757 = vld [vmem:[#allocation3] sm:$0x1]
    %v759 = vlaneseq
    %v760 = vshrl.u32 %v759, 7
    %v761 = vsub.s32 0, %v760
    %v762 = vrot.slane %v757, %v761
    %v764 = vadd.f32 %v756, %v762
    %765 = vst.msk [vmem:[%s3] sm:$0x3] %vm751, %v764
  $region21: #{tpu_custom_call.1} parent=0 // pred_fallthru
    _
  // Predicated region
  $region22: #{tpu_custom_call.1} parent=0 // pred_check
    _
  $region23: #{tpu_custom_call.1} parent=0 // pred_check_branch
    %767 = sbr.rel (0) target = $region25
  $region24: #{tpu_custom_call.1} parent=0 // pred_region
    _
  $region25: #{tpu_custom_call.1} parent=0 // pred_fallthru
    _
  // Predicated region
  $region26: #{tpu_custom_call.1} parent=0 // pred_check
    _
  $region27: #{tpu_custom_call.1} parent=0 // pred_check_branch
    %769 = sbr.rel (0) target = $region29
  $region28: #{tpu_custom_call.1} parent=0 // pred_region
    _
  $region29: #{tpu_custom_call.1} parent=0 // pred_fallthru
    _

</llo_original>
